<compile_context>
chip_gen: v7x
topology: tpu7x:2x2x1
jax: 0.10.0
libtpu: 0.0.40
codegen_flags: <defaults>
</compile_context>

<pallas_src>
import functools
import math

import jax
import jax.numpy as jnp
from jax.experimental import pallas as pl
from jax.experimental.pallas import tpu as pltpu

_BIG_NEG = -1e30  # safe "-inf" (avoids inf-inf NaNs)


def _margin_transform(cos_t, *, cos_m, sin_m, th, mm, easy_margin):
    """ArcFace margin transform on the (B, 1) target-cosine vector (wrapper)."""
    sin_t = jnp.sqrt(jnp.clip(1.0 - cos_t * cos_t, 0.0, 1.0))
    phi = cos_t * cos_m - sin_t * sin_m
    if easy_margin:
        return jnp.where(cos_t > 0.0, phi, cos_t)
    return jnp.where(cos_t - th > 0.0, phi, cos_t - mm)


# --------------------------------------------------------------------------
# Kernel 1: weight resident in VMEM (single class tile), grid = (batch tiles,)
# --------------------------------------------------------------------------
def _aam_kernel_resident(x_ref, wt_ref, lab_ref, cos_t_ref, phi_ref,
                         loss_ref, prec_ref,
                         *, s, b_valid, c_valid, b_pad, c_pad, tb):
    i = pl.program_id(0)

    # bf16 MXU matmul, f32 accumulation; classes on the lane axis.
    cosine = jnp.dot(x_ref[...], wt_ref[...],
                     preferred_element_type=jnp.float32)          # (tb, c_pad)

    col = jax.lax.broadcasted_iota(jnp.int32, (tb, c_pad), 1)
    if c_pad != c_valid:  # compile-time: mask padded class columns
        cosine = jnp.where(col < c_valid, cosine, _BIG_NEG)

    lab = lab_ref[...]                                            # (tb, 1) int32
    tgt = col == lab
    phi = phi_ref[...]                                            # (tb, 1) f32

    # Logits: precomputed phi at the target column, s * cosine elsewhere.
    logits = jnp.where(tgt, phi, cosine) * s
    m = jnp.max(logits, axis=1, keepdims=True)
    lse = m + jnp.log(jnp.sum(jnp.exp(logits - m), axis=1, keepdims=True))
    per_loss = lse - phi * s                                      # (tb, 1)

    # prec1: target cosine beats the best non-target cosine.
    nt_max = jnp.max(jnp.where(tgt, _BIG_NEG, cosine), axis=1, keepdims=True)
    correct = (cos_t_ref[...] >= nt_max).astype(jnp.float32)

    if b_pad != b_valid:  # compile-time: mask padded batch rows
        row = i * tb + jax.lax.broadcasted_iota(jnp.int32, (tb, 1), 0)
        rmask = row < b_valid
        per_loss = jnp.where(rmask, per_loss, 0.0)
        correct = jnp.where(rmask, correct, 0.0)

    loss_ref[...] = per_loss
    prec_ref[...] = correct


# --------------------------------------------------------------------------
# Kernel 2: class-tiled online logsumexp, grid = (batch tiles, class tiles)
# --------------------------------------------------------------------------
def _aam_kernel_tiled(x_ref, wt_ref, lab_ref, cos_t_ref, phi_ref, bias_ref,
                      loss_ref, prec_ref, m_acc, l_acc, cmax_acc,
                      *, s, b_valid, b_pad, tb, tc, has_cpad):
    i = pl.program_id(0)
    j = pl.program_id(1)
    last_j = pl.num_programs(1) - 1

    @pl.when(j == 0)
    def _init():
        m_acc[...] = jnp.full_like(m_acc, _BIG_NEG)
        l_acc[...] = jnp.zeros_like(l_acc)
        cmax_acc[...] = jnp.full_like(cmax_acc, _BIG_NEG)

    cosine = jnp.dot(x_ref[...], wt_ref[...],
                     preferred_element_type=jnp.float32)          # (tb, tc)
    if has_cpad:  # compile-time: 0 / -1e30 additive padding mask (one add)
        cosine = cosine + bias_ref[...]

    lab = lab_ref[...]                                            # (tb, 1)
    col = j * tc + jax.lax.broadcasted_iota(jnp.int32, (tb, tc), 1)
    tgt = col == lab

    phi = phi_ref[...]                                            # (tb, 1)
    logits = jnp.where(tgt, phi, cosine) * s

    # --- online logsumexp over class tiles ---
    tile_max = jnp.max(logits, axis=1, keepdims=True)
    m_new = jnp.maximum(m_acc[...], tile_max)
    alpha = jnp.exp(m_acc[...] - m_new)
    p = jnp.exp(logits - m_new)
    l_acc[...] = alpha * l_acc[...] + jnp.sum(p, axis=1, keepdims=True)
    m_acc[...] = m_new

    # --- running max over non-target cosines (for prec1) ---
    nt_max = jnp.max(jnp.where(tgt, _BIG_NEG, cosine), axis=1, keepdims=True)
    cmax_acc[...] = jnp.maximum(cmax_acc[...], nt_max)

    @pl.when(j == last_j)
    def _finalize():
        lse = m_acc[...] + jnp.log(l_acc[...])
        per_loss = lse - phi_ref[...] * s
        correct = (cos_t_ref[...] >= cmax_acc[...]).astype(jnp.float32)
        if b_pad != b_valid:
            row = i * tb + jax.lax.broadcasted_iota(jnp.int32, (tb, 1), 0)
            rmask = row < b_valid
            per_loss = jnp.where(rmask, per_loss, 0.0)
            correct = jnp.where(rmask, correct, 0.0)
        loss_ref[...] = per_loss
        prec_ref[...] = correct


# --------------------------------------------------------------------------
# Wrapper (forward of LossFunction): returns (loss, prec1)
# --------------------------------------------------------------------------
def aamsoftmax_loss(x, weight, label, *, margin=0.0, scale=30.0,
                    easy_margin=False, vmem_budget_bytes=None):
    """x: (B, nOut), weight: (nClasses, nOut), label: (B,).

    `margin` is the *current* value of self.m (0.0 right after __init__).
    TODO(synk): the margin schedule (LossFunction.step) is host-side state;
    pass the current margin value in as an argument each call.
    """
    B, D = x.shape
    C, Dw = weight.shape
    assert D == Dw

    cos_m = math.cos(margin)
    sin_m = math.sin(margin)
    th = math.cos(math.pi - margin)
    mm = math.sin(math.pi - margin) * margin

    # F.normalize(..., dim=1) for x and weight (f32, fused by XLA).
    eps = 1e-12
    xf = x.astype(jnp.float32)
    xn = xf / jnp.maximum(jnp.sqrt(jnp.sum(xf * xf, axis=1, keepdims=True)), eps)
    wf = weight.astype(jnp.float32)
    wn = wf / jnp.maximum(jnp.sqrt(jnp.sum(wf * wf, axis=1, keepdims=True)), eps)

    # Hoisted target cosine + ArcFace margin (B*D flops, negligible) so the
    # kernel never does a per-tile gather reduction or sqrt/where margin math.
    lab_i = label.astype(jnp.int32)
    cos_t = jnp.sum(xn * wn[lab_i], axis=1, keepdims=True)         # (B, 1) f32
    phi = _margin_transform(cos_t, cos_m=cos_m, sin_m=sin_m, th=th, mm=mm,
                            easy_margin=easy_margin)               # (B, 1) f32

    def _rup(v, m):
        return (v + m - 1) // m * m

    # Batch tile: 256 rows fills the MXU M dim and gives ~256 flops/weight-byte
    # of matmul intensity (clears the HBM roofline on v5e/v7x, close on v6e).
    # Small batches round to a multiple of 16 for clean bf16 sublane packing.
    # On v7x, batches > 256 keep n_b >= 2 so the "parallel" axis uses both TCs.
    tb = 256 if B > 256 else _rup(B, 16)
    b_pad = _rup(B, tb)
    n_b = b_pad // tb
    d_pad = _rup(D, 128)

    # Class tiling: prefer a single VMEM-resident class tile (weight DMA'd
    # once); otherwise the largest class tile that fits the VMEM budget.
    budget = 25 * 1024 * 1024 if vmem_budget_bytes is None else vmem_budget_bytes

    def _vmem_estimate(tc_):
        w_bytes = 2 * d_pad * tc_ * 2           # double-buffered bf16 W tile
        x_bytes = 2 * tb * d_pad * 2            # double-buffered bf16 x tile
        tmp_bytes = 5 * tb * tc_ * 4            # f32 elementwise temporaries
        return w_bytes + x_bytes + tmp_bytes

    c_res = _rup(C, 128)
    resident = _vmem_estimate(c_res) <= budget
    if resident:
        tc = c_res
    else:
        tc = 128
        for cand in (2048, 1024, 512, 256):
            if _vmem_estimate(cand) <= budget:
                tc = cand
                break
    c_pad = _rup(C, tc)
    n_c = c_pad // tc

    # Pad *after* casting to bf16 (no f32 padded temporaries -> ~half the
    # wrapper-side HBM traffic for the weight).
    x_p = jnp.zeros((b_pad, d_pad), jnp.bfloat16).at[:B, :D].set(
        xn.astype(jnp.bfloat16))
    w_p = jnp.zeros((d_pad, c_pad), jnp.bfloat16).at[:D, :C].set(
        wn.T.astype(jnp.bfloat16))                  # (D, C): classes on lanes
    lab_p = jnp.zeros((b_pad, 1), jnp.int32).at[:B, 0].set(lab_i)
    cos_t_p = jnp.zeros((b_pad, 1), jnp.float32).at[:B].set(cos_t)
    phi_p = jnp.zeros((b_pad, 1), jnp.float32).at[:B].set(phi)

    out_shape = (jax.ShapeDtypeStruct((b_pad, 1), jnp.float32),
                 jax.ShapeDtypeStruct((b_pad, 1), jnp.float32))
    # 32 MiB scoped VMEM: matches v6e/v7x defaults, raises v5e's 16 MiB.
    vmem_limit = 32 * 1024 * 1024

    if resident:
        kernel = functools.partial(
            _aam_kernel_resident, s=float(scale), b_valid=B, c_valid=C,
            b_pad=b_pad, c_pad=c_pad, tb=tb)
        loss_rows, correct_rows = pl.pallas_call(
            kernel,
            out_shape=out_shape,
            grid_spec=pltpu.PrefetchScalarGridSpec(
                num_scalar_prefetch=0,
                grid=(n_b,),
                in_specs=[
                    pl.BlockSpec((tb, d_pad), lambda i: (i, 0)),     # x (bf16)
                    pl.BlockSpec((d_pad, c_pad), lambda i: (0, 0)),  # W resident
                    pl.BlockSpec((tb, 1), lambda i: (i, 0)),         # labels
                    pl.BlockSpec((tb, 1), lambda i: (i, 0)),         # cos_t
                    pl.BlockSpec((tb, 1), lambda i: (i, 0)),         # phi
                ],
                out_specs=(pl.BlockSpec((tb, 1), lambda i: (i, 0)),
                           pl.BlockSpec((tb, 1), lambda i: (i, 0)))),
            compiler_params=pltpu.CompilerParams(
                dimension_semantics=("parallel",),
                vmem_limit_bytes=vmem_limit),
        )(x_p, w_p, lab_p, cos_t_p, phi_p)
    else:
        # Additive 0 / -1e30 bias row masks padded class columns (one VPU add
        # per tile instead of per-tile compares + selects).
        has_cpad = c_pad != C
        bias = jnp.where(
            jax.lax.broadcasted_iota(jnp.int32, (1, c_pad), 1) < C,
            jnp.float32(0.0), jnp.float32(_BIG_NEG))
        kernel = functools.partial(
            _aam_kernel_tiled, s=float(scale), b_valid=B, b_pad=b_pad,
            tb=tb, tc=tc, has_cpad=has_cpad)
        loss_rows, correct_rows = pl.pallas_call(
            kernel,
            out_shape=out_shape,
            grid_spec=pltpu.PrefetchScalarGridSpec(
                num_scalar_prefetch=0,
                grid=(n_b, n_c),
                in_specs=[
                    pl.BlockSpec((tb, d_pad), lambda i, j: (i, 0)),   # x (bf16)
                    pl.BlockSpec((d_pad, tc), lambda i, j: (0, j)),   # W tile
                    pl.BlockSpec((tb, 1), lambda i, j: (i, 0)),       # labels
                    pl.BlockSpec((tb, 1), lambda i, j: (i, 0)),       # cos_t
                    pl.BlockSpec((tb, 1), lambda i, j: (i, 0)),       # phi
                    pl.BlockSpec((1, tc), lambda i, j: (0, j)),       # pad bias
                ],
                out_specs=(pl.BlockSpec((tb, 1), lambda i, j: (i, 0)),
                           pl.BlockSpec((tb, 1), lambda i, j: (i, 0))),
                scratch_shapes=[
                    pltpu.VMEM((tb, 1), jnp.float32),   # running max of logits
                    pltpu.VMEM((tb, 1), jnp.float32),   # running sum of exp
                    pltpu.VMEM((tb, 1), jnp.float32),   # running non-target max
                ]),
            compiler_params=pltpu.CompilerParams(
                dimension_semantics=("parallel", "arbitrary"),
                vmem_limit_bytes=vmem_limit),
        )(x_p, w_p, lab_p, cos_t_p, phi_p, bias)

    # Means use the true (un-padded) batch size; padded rows were zeroed.
    loss = jnp.sum(loss_rows) / B
    prec1 = 100.0 * jnp.sum(correct_rows) / B
    return loss, prec1


# --------------------------------------------------------------------------
# Precision-matched pure-JAX reference (mirrors the kernel's numerics).
# --------------------------------------------------------------------------
def _matched_reference(x, weight, label, margin, scale, easy_margin=False):
    eps = 1e-12
    xf = x.astype(jnp.float32)
    xn = xf / jnp.maximum(jnp.sqrt(jnp.sum(xf * xf, axis=1, keepdims=True)), eps)
    wf = weight.astype(jnp.float32)
    wn = wf / jnp.maximum(jnp.sqrt(jnp.sum(wf * wf, axis=1, keepdims=True)), eps)
    lab = label.astype(jnp.int32)
    cos_t = jnp.sum(xn * wn[lab], axis=1, keepdims=True)
    phi = _margin_transform(cos_t, cos_m=math.cos(margin), sin_m=math.sin(margin),
                            th=math.cos(math.pi - margin),
                            mm=math.sin(math.pi - margin) * margin,
                            easy_margin=easy_margin)
    cosine = jnp.dot(xn.astype(jnp.bfloat16), wn.astype(jnp.bfloat16).T,
                     preferred_element_type=jnp.float32)
    onehot = jnp.arange(cosine.shape[1])[None, :] == lab[:, None]
    logits = jnp.where(onehot, phi, cosine) * scale
    loss = jnp.mean(jax.nn.logsumexp(logits, axis=1) - scale * phi[:, 0])
    nt_max = jnp.max(jnp.where(onehot, _BIG_NEG, cosine), axis=1, keepdims=True)
    prec = 100.0 * jnp.mean((cos_t >= nt_max).astype(jnp.float32))
    return loss, prec


if __name__ == "__main__":
    key = jax.random.PRNGKey(0)
    kx, kw, kl, kx2, kw2, kl2 = jax.random.split(key, 6)

    # ---- Test 1: small shapes -> VMEM-resident single-class-tile path ----
    B, nOut, nClasses = 8, 32, 16
    x = jax.random.normal(kx, (B, nOut), dtype=jnp.float32)
    std = math.sqrt(2.0 / (nClasses + nOut))   # xavier_normal_(gain=1)
    w = std * jax.random.normal(kw, (nClasses, nOut), dtype=jnp.float32)
    label = jax.random.randint(kl, (B,), 0, nClasses, dtype=jnp.int32)

    loss, prec1 = aamsoftmax_loss(x, w, label, margin=0.0, scale=30.0)
    jax.block_until_ready((loss, prec1))
    loss_r, prec_r = _matched_reference(x, w, label, 0.0, 30.0)
    assert abs(float(loss) - float(loss_r)) < 5e-3, (float(loss), float(loss_r))
    assert abs(float(prec1) - float(prec_r)) < 1e-3, (float(prec1), float(prec_r))

    # ---- Test 2: force the class-tiled online-softmax path (margin > 0) ----
    B2, nOut2, nClasses2 = 8, 32, 300
    x2 = jax.random.normal(kx2, (B2, nOut2), dtype=jnp.float32)
    std2 = math.sqrt(2.0 / (nClasses2 + nOut2))
    w2 = std2 * jax.random.normal(kw2, (nClasses2, nOut2), dtype=jnp.float32)
    label2 = jax.random.randint(kl2, (B2,), 0, nClasses2, dtype=jnp.int32)

    loss_t, prec_t = aamsoftmax_loss(x2, w2, label2, margin=0.1, scale=30.0,
                                     vmem_budget_bytes=0)     # forces tiled path
    loss_s, prec_s = aamsoftmax_loss(x2, w2, label2, margin=0.1, scale=30.0)
    jax.block_until_ready((loss_t, prec_t, loss_s, prec_s))
    assert abs(float(loss_t) - float(loss_s)) < 5e-3, (float(loss_t), float(loss_s))
    assert abs(float(prec_t) - float(prec_s)) < 1e-3, (float(prec_t), float(prec_s))

    print("KERNEL_OK")
</pallas_src>

<mosaic_0001>
module attributes {stable_mosaic.version = 11 : i64} {
  func.func @_aam_kernel_resident(%arg0: i32, %arg1: memref<16x128xbf16, #tpu.memory_space<vmem>>, %arg2: memref<128x128xbf16, #tpu.memory_space<vmem>>, %arg3: memref<16x1xi32, #tpu.memory_space<vmem>>, %arg4: memref<16x1xf32, #tpu.memory_space<vmem>>, %arg5: memref<16x1xf32, #tpu.memory_space<vmem>>, %arg6: memref<16x1xf32, #tpu.memory_space<vmem>>, %arg7: memref<16x1xf32, #tpu.memory_space<vmem>>) attributes {dimension_semantics = [#tpu.dimension_semantics<parallel>], iteration_bounds = array<i64: 1>, scalar_prefetch = 0 : i64, scratch_operands = 0 : i64, tpu.core_type = #tpu.core_type<tc>, window_params = [{transform_indices = @transform_0, window_bounds = array<i64: 16, 128>}, {pipeline_mode = #tpu.pipeline_mode<synchronous>, transform_indices = @transform_1, window_bounds = array<i64: 128, 128>}, {transform_indices = @transform_2, window_bounds = array<i64: 16, 1>}, {transform_indices = @transform_3, window_bounds = array<i64: 16, 1>}, {transform_indices = @transform_4, window_bounds = array<i64: 16, 1>}, {transform_indices = @transform_5, window_bounds = array<i64: 16, 1>}, {transform_indices = @transform_6, window_bounds = array<i64: 16, 1>}]} {
    %c0 = arith.constant 0 : index
    %c0_0 = arith.constant 0 : index
    %0 = vector.load %arg1[%c0, %c0_0] : memref<16x128xbf16, #tpu.memory_space<vmem>>, vector<16x128xbf16>
    %c0_1 = arith.constant 0 : index
    %c0_2 = arith.constant 0 : index
    %1 = vector.load %arg2[%c0_1, %c0_2] : memref<128x128xbf16, #tpu.memory_space<vmem>>, vector<128x128xbf16>
    %cst = arith.constant dense<0.000000e+00> : vector<16x128xf32>
    %2 = tpu.matmul %0, %1, %cst {dimension_numbers = #tpu.dot_dimension_numbers<[1], [0], [0], [1], [0, 0, 1, 1], [], []>} : vector<16x128xbf16>, vector<128x128xbf16>, vector<16x128xf32> -> vector<16x128xf32>
    %3 = tpu.iota {dimensions = array<i32: 1>} : vector<16x128xi32>
    %c16_i32 = arith.constant 16 : i32
    %4 = vector.broadcast %c16_i32 : i32 to vector<16x128xi32>
    %5 = arith.cmpi slt, %3, %4 : vector<16x128xi32>
    %cst_3 = arith.constant -1.000000e+30 : f32
    %6 = vector.broadcast %cst_3 : f32 to vector<16x128xf32>
    %7 = arith.select %5, %2, %6 : vector<16x128xi1>, vector<16x128xf32>
    %c0_4 = arith.constant 0 : index
    %c0_5 = arith.constant 0 : index
    %8 = vector.load %arg3[%c0_4, %c0_5] : memref<16x1xi32, #tpu.memory_space<vmem>>, vector<16x1xi32>
    %9 = vector.broadcast %8 : vector<16x1xi32> to vector<16x128xi32>
    %10 = arith.cmpi eq, %3, %9 : vector<16x128xi32>
    %c0_6 = arith.constant 0 : index
    %c0_7 = arith.constant 0 : index
    %11 = vector.load %arg5[%c0_6, %c0_7] : memref<16x1xf32, #tpu.memory_space<vmem>>, vector<16x1xf32>
    %12 = vector.shape_cast %11 : vector<16x1xf32> to vector<16x1xf32>
    %13 = vector.broadcast %12 : vector<16x1xf32> to vector<16x128xf32>
    %14 = arith.select %10, %13, %7 : vector<16x128xi1>, vector<16x128xf32>
    %cst_8 = arith.constant 3.000000e+01 : f32
    %15 = vector.broadcast %cst_8 : f32 to vector<16x128xf32>
    %16 = arith.mulf %14, %15 : vector<16x128xf32>
    %cst_9 = arith.constant dense<0xFF800000> : vector<16xf32>
    %17 = vector.multi_reduction <maximumf>, %16, %cst_9 [1] : vector<16x128xf32> to vector<16xf32>
    %18 = vector.shape_cast %17 : vector<16xf32> to vector<16x1xf32>
    %19 = vector.broadcast %18 : vector<16x1xf32> to vector<16x128xf32>
    %20 = arith.subf %16, %19 : vector<16x128xf32>
    %21 = math.exp %20 : vector<16x128xf32>
    %cst_10 = arith.constant dense<0.000000e+00> : vector<16xf32>
    %22 = vector.multi_reduction <add>, %21, %cst_10 [1] : vector<16x128xf32> to vector<16xf32>
    %23 = vector.shape_cast %22 : vector<16xf32> to vector<16x1xf32>
    %24 = math.log %23 : vector<16x1xf32>
    %25 = arith.addf %18, %24 : vector<16x1xf32>
    %cst_11 = arith.constant 3.000000e+01 : f32
    %26 = vector.broadcast %cst_11 : f32 to vector<16x1xf32>
    %27 = arith.mulf %11, %26 : vector<16x1xf32>
    %28 = arith.subf %25, %27 : vector<16x1xf32>
    %cst_12 = arith.constant -1.000000e+30 : f32
    %29 = vector.broadcast %cst_12 : f32 to vector<16x128xf32>
    %30 = arith.select %10, %29, %7 : vector<16x128xi1>, vector<16x128xf32>
    %cst_13 = arith.constant dense<0xFF800000> : vector<16xf32>
    %31 = vector.multi_reduction <maximumf>, %30, %cst_13 [1] : vector<16x128xf32> to vector<16xf32>
    %32 = vector.shape_cast %31 : vector<16xf32> to vector<16x1xf32>
    %c0_14 = arith.constant 0 : index
    %c0_15 = arith.constant 0 : index
    %33 = vector.load %arg4[%c0_14, %c0_15] : memref<16x1xf32, #tpu.memory_space<vmem>>, vector<16x1xf32>
    %34 = arith.cmpf oge, %33, %32 : vector<16x1xf32>
    %35 = arith.extui %34 : vector<16x1xi1> to vector<16x1xi32>
    %36 = arith.sitofp %35 : vector<16x1xi32> to vector<16x1xf32>
    %c16_i32_16 = arith.constant 16 : i32
    %37 = arith.muli %arg0, %c16_i32_16 : i32
    %38 = tpu.iota {dimensions = array<i32: 0>} : vector<16x1xi32>
    %39 = vector.broadcast %37 : i32 to vector<16x1xi32>
    %40 = arith.addi %39, %38 : vector<16x1xi32>
    %c8_i32 = arith.constant 8 : i32
    %41 = vector.broadcast %c8_i32 : i32 to vector<16x1xi32>
    %42 = arith.cmpi slt, %40, %41 : vector<16x1xi32>
    %cst_17 = arith.constant 0.000000e+00 : f32
    %43 = vector.broadcast %cst_17 : f32 to vector<16x1xf32>
    %44 = arith.select %42, %28, %43 : vector<16x1xi1>, vector<16x1xf32>
    %cst_18 = arith.constant 0.000000e+00 : f32
    %45 = vector.broadcast %cst_18 : f32 to vector<16x1xf32>
    %46 = arith.select %42, %36, %45 : vector<16x1xi1>, vector<16x1xf32>
    %c0_19 = arith.constant 0 : index
    %c0_20 = arith.constant 0 : index
    %47 = vector.load %arg6[%c0_19, %c0_20] : memref<16x1xf32, #tpu.memory_space<vmem>>, vector<16x1xf32>
    tpu.vector_store %arg6[%c0_19, %c0_20], %44 {strides = array<i32>} : memref<16x1xf32, #tpu.memory_space<vmem>>, vector<16x1xf32>,
    %c0_21 = arith.constant 0 : index
    %c0_22 = arith.constant 0 : index
    %48 = vector.load %arg7[%c0_21, %c0_22] : memref<16x1xf32, #tpu.memory_space<vmem>>, vector<16x1xf32>
    tpu.vector_store %arg7[%c0_21, %c0_22], %46 {strides = array<i32>} : memref<16x1xf32, #tpu.memory_space<vmem>>, vector<16x1xf32>,
    return
  }
  func.func @transform_0(%arg0: i32) -> (i32, i32) {
    %c0_i32 = arith.constant 0 : i32
    %c0_i32_0 = arith.constant 0 : i32
    return %arg0, %c0_i32 : i32, i32
  }
  func.func @transform_1(%arg0: i32) -> (i32, i32) {
    %c0_i32 = arith.constant 0 : i32
    %c0_i32_0 = arith.constant 0 : i32
    %c0_i32_1 = arith.constant 0 : i32
    return %c0_i32, %c0_i32_0 : i32, i32
  }
  func.func @transform_2(%arg0: i32) -> (i32, i32) {
    %c0_i32 = arith.constant 0 : i32
    %c0_i32_0 = arith.constant 0 : i32
    return %arg0, %c0_i32 : i32, i32
  }
  func.func @transform_3(%arg0: i32) -> (i32, i32) {
    %c0_i32 = arith.constant 0 : i32
    %c0_i32_0 = arith.constant 0 : i32
    return %arg0, %c0_i32 : i32, i32
  }
  func.func @transform_4(%arg0: i32) -> (i32, i32) {
    %c0_i32 = arith.constant 0 : i32
    %c0_i32_0 = arith.constant 0 : i32
    return %arg0, %c0_i32 : i32, i32
  }
  func.func @transform_5(%arg0: i32) -> (i32, i32) {
    %c0_i32 = arith.constant 0 : i32
    %c0_i32_0 = arith.constant 0 : i32
    return %arg0, %c0_i32 : i32, i32
  }
  func.func @transform_6(%arg0: i32) -> (i32, i32) {
    %c0_i32 = arith.constant 0 : i32
    %c0_i32_0 = arith.constant 0 : i32
    return %arg0, %c0_i32 : i32, i32
  }
}

</mosaic_0001>

<llo_original>
// kernel: tpu_custom_call.1
$region0: #{tpu_custom_call.1}
  #allocation0 [shape = 'u32[]', space=smem, size = 0x4, offset = 0x4, fixed_abs, tag = 'smem constant byte address 0x4 - core index']
  #allocation1 [shape = 'u32[144,128]{1,0:T(1,128)}', space=vmem, size = 0x12000, scoped, tag = 'internal scratch']
  %s0 = inlined_call_operand.vmem [shape: bf16[16,128], index: 0, kind: input, shape index: {}]
  %s1 = inlined_call_operand.hbm [shape: bf16[128,128], index: 1, kind: input, shape index: {}]
  %s2 = inlined_call_operand.vmem [shape: s32[16,1], index: 2, kind: input, shape index: {}]
  %s3 = inlined_call_operand.vmem [shape: f32[16,1], index: 3, kind: input, shape index: {}]
  %s4 = inlined_call_operand.vmem [shape: f32[16,1], index: 4, kind: input, shape index: {}]
  %s5 = inlined_call_operand.vmem [shape: f32[16,1], index: 5, kind: output, shape index: {0}]
  %s6 = inlined_call_operand.vmem [shape: f32[16,1], index: 6, kind: output, shape index: {1}]
  %7 = xla_tuple %s5, %s6
  %s8 = sld [smem:[#allocation0]]
  $region42: #{tpu_custom_call.1} parent=0
    _
  %s10 = ssub.s32 1, %s8
  %s11 = scalar_select 0, %s10, %s8
  $region1: #{tpu_custom_call.1} parent=0
    #allocation2 [shape = 'u8[32768]{0}', space=vmem, size = 0x8000, scoped, tag = 'input window, operand 1, single buffered']
    #allocation3 [shape = 's32[1]{0}', space=sflag, size = 0x4, scoped, tag = 'scoped memory for tpu_custom_call.1']
    %12 = vsyncpa [#allocation3], 0
    // Predicated region
    $region2: #{tpu_custom_call.1} parent=1 // pred_check
      _
    $region3: #{tpu_custom_call.1} parent=1 // pred_check_branch
      %14 = sbr.rel (0) target = $region5
    $region4: #{tpu_custom_call.1} parent=1 // pred_region
      _
    $region5: #{tpu_custom_call.1} parent=1 // pred_fallthru
      _
    // Predicated region
    $region6: #{tpu_custom_call.1} parent=1 // pred_check
      _
    $region7: #{tpu_custom_call.1} parent=1 // pred_check_branch
      %16 = sbr.rel (0) target = $region9
    $region8: #{tpu_custom_call.1} parent=1 // pred_region
      %s18 = ssub.s32 1024, 1024
      %19 = vsyncadd [#allocation3], %s18
      %s20 = sshll.u32 [#allocation2], 4
      %s21 = int_to_ptr.vmem [resolvable:$true] %s20
      %26 = dma.hbm_to_vmem [thread:$0]  %s1, 1024, %s21, [#allocation3], 64, 64, 4
    $region9: #{tpu_custom_call.1} parent=1 // pred_fallthru
      _
    // Predicated region
    $region10: #{tpu_custom_call.1} parent=1 // pred_check
      _
    $region11: #{tpu_custom_call.1} parent=1 // pred_check_branch
      %28 = sbr.rel (0) target = $region13
    $region12: #{tpu_custom_call.1} parent=1 // pred_region
      _
    $region13: #{tpu_custom_call.1} parent=1 // pred_fallthru
      _
    // Predicated region
    $region14: #{tpu_custom_call.1} parent=1 // pred_check
      _
    $region15: #{tpu_custom_call.1} parent=1 // pred_check_branch
      %30 = sbr.rel (0) target = $region17
    $region16: #{tpu_custom_call.1} parent=1 // pred_region
      _
    $region17: #{tpu_custom_call.1} parent=1 // pred_fallthru
      _
    // Predicated region
    $region18: #{tpu_custom_call.1} parent=1 // pred_check
      _
    $region19: #{tpu_custom_call.1} parent=1 // pred_check_branch
      %32 = sbr.rel (0) target = $region21
    $region20: #{tpu_custom_call.1} parent=1 // pred_region
      _
    $region21: #{tpu_custom_call.1} parent=1 // pred_fallthru
      _
    // Predicated region
    $region22: #{tpu_custom_call.1} parent=1 // pred_check
      _
    $region23: #{tpu_custom_call.1} parent=1 // pred_check_branch
      %34 = sbr.rel (0) target = $region25
    $region24: #{tpu_custom_call.1} parent=1 // pred_region
      %35 = dma.done [#allocation3], 1024
    $region25: #{tpu_custom_call.1} parent=1 // pred_fallthru
      _
    %v37 = vld [vmem:[%s0] sm:$0xf]
    %v38 = vld [vmem:[%s0 + $0x4] sm:$0xf]
    %v39 = vld [vmem:[#allocation2] sm:$0xf]
    %v40 = vld [vmem:[#allocation2 + $0x4] sm:$0xf]
    %v41 = vld [vmem:[#allocation2 + $0x8] sm:$0xf]
    %v42 = vld [vmem:[#allocation2 + $0xc] sm:$0xf]
    %v43 = vld [vmem:[#allocation2 + $0x10] sm:$0xf]
    %v44 = vld [vmem:[#allocation2 + $0x14] sm:$0xf]
    %v45 = vld [vmem:[#allocation2 + $0x18] sm:$0xf]
    %v46 = vld [vmem:[#allocation2 + $0x1c] sm:$0xf]
    %v47 = vld [vmem:[#allocation2 + $0x20] sm:$0xf]
    %v48 = vld [vmem:[#allocation2 + $0x24] sm:$0xf]
    %v49 = vld [vmem:[#allocation2 + $0x28] sm:$0xf]
    %v50 = vld [vmem:[#allocation2 + $0x2c] sm:$0xf]
    %v51 = vld [vmem:[#allocation2 + $0x30] sm:$0xf]
    %v52 = vld [vmem:[#allocation2 + $0x34] sm:$0xf]
    %v53 = vld [vmem:[#allocation2 + $0x38] sm:$0xf]
    %v54 = vld [vmem:[#allocation2 + $0x3c] sm:$0xf]
    %v57 = vunpack.c.l.b16 %v37
    %v58 = vunpack.c.l.b16 %v38
    %v59 = vpack.c.b16 %v58, %v57
    %v77 = vunpack.c.l.b16 %v39
    %v78 = vunpack.c.l.b16 %v40
    %v79 = vunpack.c.l.b16 %v41
    %v80 = vunpack.c.l.b16 %v42
    %v81 = vunpack.c.l.b16 %v43
    %v82 = vunpack.c.l.b16 %v44
    %v83 = vunpack.c.l.b16 %v45
    %v84 = vunpack.c.l.b16 %v46
    %v85 = vunpack.c.l.b16 %v47
    %v86 = vunpack.c.l.b16 %v48
    %v87 = vunpack.c.l.b16 %v49
    %v88 = vunpack.c.l.b16 %v50
    %v89 = vunpack.c.l.b16 %v51
    %v90 = vunpack.c.l.b16 %v52
    %v91 = vunpack.c.l.b16 %v53
    %v92 = vunpack.c.l.b16 %v54
    %v93 = vpack.c.b16 %v78, %v77
    %v94 = vpack.c.b16 %v80, %v79
    %v95 = vpack.c.b16 %v82, %v81
    %v96 = vpack.c.b16 %v84, %v83
    %v97 = vpack.c.b16 %v86, %v85
    %v98 = vpack.c.b16 %v88, %v87
    %v99 = vpack.c.b16 %v90, %v89
    %v100 = vpack.c.b16 %v92, %v91
    %109 = vmatprep.subr.bf16.mxu0 0
    %110 = vmatpush1.bf16.msra.mxu0 %v93
    %111 = vmatprep.subr.bf16.mxu0 0
    %112 = vmatpush1.bf16.msra.mxu0 %v94
    %113 = vmatprep.subr.bf16.mxu0 0
    %114 = vmatpush1.bf16.msra.mxu0 %v95
    %115 = vmatprep.subr.bf16.mxu0 0
    %116 = vmatpush1.bf16.msra.mxu0 %v96
    %117 = vmatprep.subr.bf16.mxu0 0
    %118 = vmatpush1.bf16.msra.mxu0 %v97
    %119 = vmatprep.subr.bf16.mxu0 0
    %120 = vmatpush1.bf16.msra.mxu0 %v98
    %121 = vmatprep.subr.bf16.mxu0 0
    %122 = vmatpush1.bf16.msra.mxu0 %v99
    %123 = vmatprep.subr.bf16.mxu0 0
    %124 = vmatpush1.bf16.msra.mxu0 %v100
    %125 = vmatprep.subr.bf16.mxu0 0
    %126 = vmatpush1.bf16.msra.mxu0 0
    %127 = vmatprep.subr.bf16.mxu0 0
    %128 = vmatpush1.bf16.msra.mxu0 0
    %129 = vmatprep.subr.bf16.mxu0 0
    %130 = vmatpush1.bf16.msra.mxu0 0
    %131 = vmatprep.subr.bf16.mxu0 0
    %132 = vmatpush1.bf16.msra.mxu0 0
    %133 = vmatprep.subr.bf16.mxu0 0
    %134 = vmatpush1.bf16.msra.mxu0 0
    %135 = vmatprep.subr.bf16.mxu0 0
    %136 = vmatpush1.bf16.msra.mxu0 0
    %137 = vmatprep.subr.bf16.mxu0 0
    %138 = vmatpush1.bf16.msra.mxu0 0
    %139 = vmatprep.subr.bf16.mxu0 0
    %140 = vmatpush1.bf16.msra.mxu0 0
    %141 = vmatprep.mubr.bf16.mxu0 0
    %142 = vmatmul.mubr.bf16.gmra.mrb[0].mxu0 %v59
    %v143 = vpop.f32.mrb[0].mxu0
    %v144 = vadd.f32 0.0, %v143
    %v145 = vpop.f32.mrb[0].mxu0
    %v146 = vpop.f32.mrb[0].mxu0
    %v147 = vadd.f32 0.0, %v146
    %v148 = vpop.f32.mrb[0].mxu0
    %149 = vdwg.mxu0
    %v150 = vlaneseq
    %v151 = vand.u32 %v150, 127
    %vm152 = vcmp.lt.s32.totalorder %v151, 16
    %v153 = vsel %vm152, %v144, -1e+30
    %v154 = vsel %vm152, %v147, -1e+30
    %v155 = vld [vmem:[%s2] sm:$0xff]
    %v156 = vld [vmem:[%s2 + $0x8] sm:$0xff]
    %157 = vset.pattern.permute.xlu0 0
    %158 = vperm.xlu0 %157, %v155
    %v159 = vpop.permute.xlu0 %158
    %160 = vset.pattern.permute.xlu0 0
    %161 = vperm.xlu0 %160, %v156
    %v162 = vpop.permute.xlu0 %161
    %vm163 = vcmp.eq.s32.totalorder %v151, %v159
    %vm164 = vcmp.eq.s32.totalorder %v151, %v162
    %v165 = vld [vmem:[%s4] sm:$0xff]
    %v166 = vld [vmem:[%s4 + $0x8] sm:$0xff]
    %168 = vset.pattern.permute.xlu0 0
    %169 = vperm.xlu0 %168, %v165
    %v170 = vpop.permute.xlu0 %169
    %173 = vset.pattern.permute.xlu0 0
    %174 = vperm.xlu0 %173, %v166
    %v175 = vpop.permute.xlu0 %174
    %v177 = vsel %vm163, %v170, %v153
    %v178 = vsel %vm164, %v175, %v154
    %v179 = vmul.f32 %v177, 30.0
    %v180 = vmul.f32 %v178, 30.0
    %181 = vmax.xlane.f32.xlu0 %v179
    %v182 = vpop.xlane.xlu0 %181
    %183 = vmax.xlane.f32.xlu0 %v180
    %v184 = vpop.xlane.xlu0 %183
    %v185 = vsub.f32 %v179, %v182
    %v186 = vsub.f32 %v180, %v184
    %v187 = vmul.f32 %v185, 1.442695
    %v188 = vpow.pop %v187
    %v189 = vmul.f32 %v186, 1.442695
    %v190 = vpow.pop %v189
    %191 = vadd.xlane.f32.xlu0 %v188
    %v192 = vpop.xlane.xlu0 %191
    %193 = vadd.xlane.f32.xlu0 %v190
    %v194 = vpop.xlane.xlu0 %193
    %v195 = vlog2.pop %v192
    %v196 = vmul.f32 %v195, 0.6931472
    %v197 = vlog2.pop %v194
    %v198 = vmul.f32 %v197, 0.6931472
    %v199 = vadd.f32 %v182, %v196
    %v200 = vadd.f32 %v184, %v198
    %v201 = vmul.f32 %v165, 30.0
    %v202 = vmul.f32 %v166, 30.0
    %v203 = vsub.f32 %v199, %v201
    %v204 = vsub.f32 %v200, %v202
    %v205 = vsel %vm163, -1e+30, %v153
    %v206 = vsel %vm164, -1e+30, %v154
    %207 = vmax.xlane.f32.xlu0 %v205
    %v208 = vpop.xlane.xlu0 %207
    %209 = vmax.xlane.f32.xlu0 %v206
    %v210 = vpop.xlane.xlu0 %209
    %v211 = vld [vmem:[%s3] sm:$0xff]
    %v212 = vld [vmem:[%s3 + $0x8] sm:$0xff]
    %vm213 = vcmp.ge.f32.partialorder %v211, %v208
    %vm214 = vcmp.ge.f32.partialorder %v212, %v210
    %v215 = vsel %vm213, 1, 0
    %v216 = vsel %vm214, 1, 0
    %v217 = vcvt.s32.f32 %v215
    %v218 = vcvt.s32.f32 %v216
    %s219 = smul.u32 0, 16
    %v220 = vlaneseq
    %v221 = vshrl.u32 %v220, 7
    %v222 = vadd.s32 %v221, 8
    %v223 = vstv %s219
    %v224 = vadd.s32 %v223, %v221
    %v225 = vadd.s32 %v223, %v222
    %vm226 = vcmp.lt.s32.totalorder %v224, 8
    %vm227 = vcmp.lt.s32.totalorder %v225, 8
    %v228 = vsel %vm226, %v203, 0.0
    %v229 = vsel %vm227, %v204, 0.0
    %v230 = vsel %vm226, %v217, 0.0
    %v231 = vsel %vm227, %v218, 0.0
    %vm232 = vcmask 7168
    %233 = vst.msk [vmem:[%s5] sm:$0xff] %vm232, %v228
    %234 = vst.msk [vmem:[%s5 + $0x8] sm:$0xff] %vm232, %v229
    %235 = vst.msk [vmem:[%s6] sm:$0xff] %vm232, %v230
    %236 = vst.msk [vmem:[%s6 + $0x8] sm:$0xff] %vm232, %v231
    // Predicated region
    $region26: #{tpu_custom_call.1} parent=1 // pred_check
      _
    $region27: #{tpu_custom_call.1} parent=1 // pred_check_branch
      %238 = sbr.rel (0) target = $region29
    $region28: #{tpu_custom_call.1} parent=1 // pred_region
      _
    $region29: #{tpu_custom_call.1} parent=1 // pred_fallthru
      _
    // Predicated region
    $region30: #{tpu_custom_call.1} parent=1 // pred_check
      _
    $region31: #{tpu_custom_call.1} parent=1 // pred_check_branch
      %240 = sbr.rel (0) target = $region33
    $region32: #{tpu_custom_call.1} parent=1 // pred_region
      _
    $region33: #{tpu_custom_call.1} parent=1 // pred_fallthru
      _
    // Predicated region
    $region34: #{tpu_custom_call.1} parent=1 // pred_check
      _
    $region35: #{tpu_custom_call.1} parent=1 // pred_check_branch
      %242 = sbr.rel (0) target = $region37
    $region36: #{tpu_custom_call.1} parent=1 // pred_region
      _
    $region37: #{tpu_custom_call.1} parent=1 // pred_fallthru
      _
    // Predicated region
    $region38: #{tpu_custom_call.1} parent=1 // pred_check
      _
    $region39: #{tpu_custom_call.1} parent=1 // pred_check_branch
      %244 = sbr.rel (0) target = $region41
    $region40: #{tpu_custom_call.1} parent=1 // pred_region
      _
    $region41: #{tpu_custom_call.1} parent=1 // pred_fallthru
      _
    %245 = vsyncpa [#allocation3], 1

</llo_original>
